<compile_context>
chip_gen: v6e
topology: v6e:2x2x1
jax: 0.10.0
libtpu: 0.0.40
codegen_flags: <defaults>
</compile_context>

<pallas_src>
import jax
import jax.numpy as jnp
from jax.experimental import pallas as pl
from jax.experimental.pallas import tpu as pltpu

ALPHA = 10  # self.alpha in the PyTorch module (integer -> power chain below)


def _round_up(v, m):
    return ((v + m - 1) // m) * m


def _kmeans_kernel(x_ref, ct_ref, csq_ref, kmask_ref, dist_ref, w_ref):
    # x_ref:     (tn, D)       tile of samples (input dtype)
    # ct_ref:    (D, K_pad)    centers, pre-transposed (input dtype)
    # csq_ref:   (1, K_pad)    precomputed |c|^2 per (padded) cluster, f32
    # kmask_ref: (1, K_pad)    1.0 for real clusters, 0.0 for padding, f32
    # dist_ref:  (tn, K_pad)   squared distances (f32)
    # w_ref:     (tn, K_pad)   normalized weights (f32)
    x = x_ref[...]                                   # (tn, D), native dtype
    xf = x.astype(jnp.float32)
    x_sq = jnp.sum(xf * xf, axis=1, keepdims=True)   # (tn, 1)

    # MXU: cross term x @ c^T with f32 accumulation.
    xc = jnp.dot(x, ct_ref[...], preferred_element_type=jnp.float32)  # (tn, K_pad)

    dist = x_sq + csq_ref[...] - 2.0 * xc            # (tn, K_pad)
    dist = jnp.maximum(dist, 0.0)                    # guard cancellation

    # we = (dist + 1)^-ALPHA with ALPHA == 10: reciprocal + squaring chain.
    inv = pl.reciprocal(dist + 1.0, approx=False)    # (d+1)^-1
    inv2 = inv * inv                                 # ^-2
    inv4 = inv2 * inv2                               # ^-4
    inv8 = inv4 * inv4                               # ^-8
    we = inv8 * inv2                                 # ^-10
    we = we * kmask_ref[...]                         # zero out padded clusters

    denom = jnp.sum(we, axis=1, keepdims=True)       # (tn, 1)
    weight = we * pl.reciprocal(denom, approx=False)

    dist_ref[...] = dist.astype(dist_ref.dtype)
    w_ref[...] = weight.astype(w_ref.dtype)


def kmeans_forward(x, centers, *, tn=256):
    """Returns (distance, weight), each shaped (N, K) float32."""
    N, D = x.shape
    K, Dc = centers.shape
    assert D == Dc

    # Lane-dense cluster axis.
    K_pad = _round_up(K, 128)

    # Sample tile: multiple of 8, no larger than needed; pad N to a multiple.
    tn_eff = _round_up(min(tn, _round_up(N, 8)), 8)
    N_pad = _round_up(N, tn_eff)

    x_p = x if N_pad == N else jnp.pad(x, ((0, N_pad - N), (0, 0)))

    # Hoisted center-side invariants (computed once, outside the kernel).
    c_pad = jnp.pad(centers, ((0, K_pad - K), (0, 0)))                 # (K_pad, D)
    c_t = jnp.transpose(c_pad)                                         # (D, K_pad)
    c_f32 = c_pad.astype(jnp.float32)
    c_sq = jnp.sum(c_f32 * c_f32, axis=1)[None, :]                     # (1, K_pad)
    k_mask = (jnp.arange(K_pad) < K).astype(jnp.float32)[None, :]      # (1, K_pad)

    grid = (N_pad // tn_eff,)
    out_shape = (
        jax.ShapeDtypeStruct((N_pad, K_pad), jnp.float32),
        jax.ShapeDtypeStruct((N_pad, K_pad), jnp.float32),
    )

    dist_p, w_p = pl.pallas_call(
        _kmeans_kernel,
        out_shape=out_shape,
        grid_spec=pltpu.PrefetchScalarGridSpec(
            num_scalar_prefetch=0,
            grid=grid,
            in_specs=[
                pl.BlockSpec((tn_eff, D), lambda i: (i, 0)),   # x tile
                pl.BlockSpec((D, K_pad), lambda i: (0, 0)),    # centers^T (resident)
                pl.BlockSpec((1, K_pad), lambda i: (0, 0)),    # |c|^2
                pl.BlockSpec((1, K_pad), lambda i: (0, 0)),    # cluster mask
            ],
            out_specs=[
                pl.BlockSpec((tn_eff, K_pad), lambda i: (i, 0)),  # distance tile
                pl.BlockSpec((tn_eff, K_pad), lambda i: (i, 0)),  # weight tile
            ],
        ),
        compiler_params=pltpu.CompilerParams(
            dimension_semantics=("parallel",),
        ),
    )(x_p, c_t, c_sq, k_mask)

    return dist_p[:N, :K], w_p[:N, :K]


def kmeans_reference(x, centers):
    x = x.astype(jnp.float32)
    centers = centers.astype(jnp.float32)
    dist = jnp.sum((x[:, None, :] - centers[None, :, :]) ** 2, axis=-1)
    we = jnp.exp(-float(ALPHA) * jnp.log(dist + 1.0))
    weight = we / jnp.sum(we, axis=1, keepdims=True)
    return dist, weight


if __name__ == "__main__":
    # N samples, D features, K clusters (K=100 mirrors the module's default
    # n_clusters=100 and exercises the pad-to-128 path; N=1024 with tn=256
    # gives a 4-step grid so the pipeline / megacore split is exercised).
    N, D, K = 1024, 32, 100

    key = jax.random.PRNGKey(0)
    kx, kinit = jax.random.split(key)

    x = jax.random.normal(kx, (N, D), dtype=jnp.float32)

    # Deterministic "random row" center init, mirroring
    # torch.randint(0, N, (K,)) followed by inputMatrix[init_row].
    init_rows = jax.random.randint(kinit, (K,), 0, N)
    centers = x[init_rows]                                    # (K, D)

    distance, weight = kmeans_forward(x, centers, tn=256)
    jax.block_until_ready((distance, weight))

    # Sanity check against a pure-JAX reference (tolerances loosened slightly
    # for the |x|^2 + |c|^2 - 2 x.c cancellation and the power-chain rewrite).
    ref_d, ref_w = kmeans_reference(x, centers)
    assert distance.shape == (N, K) and weight.shape == (N, K)
    assert jnp.allclose(distance, ref_d, atol=1e-3, rtol=1e-4)
    assert jnp.allclose(weight, ref_w, atol=2e-3, rtol=1e-3)

    print("KERNEL_OK")
</pallas_src>

<mosaic_0001>
module attributes {stable_mosaic.version = 11 : i64} {
  func.func @_kmeans_kernel(%arg0: i32, %arg1: memref<256x32xf32, #tpu.memory_space<vmem>>, %arg2: memref<32x128xf32, #tpu.memory_space<vmem>>, %arg3: memref<1x128xf32, #tpu.memory_space<vmem>>, %arg4: memref<1x128xf32, #tpu.memory_space<vmem>>, %arg5: memref<256x128xf32, #tpu.memory_space<vmem>>, %arg6: memref<256x128xf32, #tpu.memory_space<vmem>>) attributes {dimension_semantics = [#tpu.dimension_semantics<parallel>], iteration_bounds = array<i64: 4>, scalar_prefetch = 0 : i64, scratch_operands = 0 : i64, tpu.core_type = #tpu.core_type<tc>, window_params = [{transform_indices = @transform_0, window_bounds = array<i64: 256, 32>}, {pipeline_mode = #tpu.pipeline_mode<synchronous>, transform_indices = @transform_1, window_bounds = array<i64: 32, 128>}, {pipeline_mode = #tpu.pipeline_mode<synchronous>, transform_indices = @transform_2, window_bounds = array<i64: 1, 128>}, {pipeline_mode = #tpu.pipeline_mode<synchronous>, transform_indices = @transform_3, window_bounds = array<i64: 1, 128>}, {transform_indices = @transform_4, window_bounds = array<i64: 256, 128>}, {transform_indices = @transform_5, window_bounds = array<i64: 256, 128>}]} {
    %c0 = arith.constant 0 : index
    %c0_0 = arith.constant 0 : index
    %0 = vector.load %arg1[%c0, %c0_0] : memref<256x32xf32, #tpu.memory_space<vmem>>, vector<256x32xf32>
    %1 = arith.mulf %0, %0 : vector<256x32xf32>
    %cst = arith.constant dense<0.000000e+00> : vector<256xf32>
    %2 = vector.multi_reduction <add>, %1, %cst [1] : vector<256x32xf32> to vector<256xf32>
    %3 = vector.shape_cast %2 : vector<256xf32> to vector<256x1xf32>
    %c0_1 = arith.constant 0 : index
    %c0_2 = arith.constant 0 : index
    %4 = vector.load %arg2[%c0_1, %c0_2] : memref<32x128xf32, #tpu.memory_space<vmem>>, vector<32x128xf32>
    %cst_3 = arith.constant dense<0.000000e+00> : vector<256x128xf32>
    %5 = tpu.matmul %0, %4, %cst_3 {dimension_numbers = #tpu.dot_dimension_numbers<[1], [0], [0], [1], [0, 0, 1, 1], [], []>} : vector<256x32xf32>, vector<32x128xf32>, vector<256x128xf32> -> vector<256x128xf32>
    %c0_4 = arith.constant 0 : index
    %c0_5 = arith.constant 0 : index
    %6 = vector.load %arg3[%c0_4, %c0_5] : memref<1x128xf32, #tpu.memory_space<vmem>>, vector<1x128xf32>
    %7 = vector.broadcast %3 : vector<256x1xf32> to vector<256x128xf32>
    %8 = vector.broadcast %6 : vector<1x128xf32> to vector<256x128xf32>
    %9 = arith.addf %7, %8 : vector<256x128xf32>
    %cst_6 = arith.constant 2.000000e+00 : f32
    %10 = vector.broadcast %cst_6 : f32 to vector<256x128xf32>
    %11 = arith.mulf %10, %5 : vector<256x128xf32>
    %12 = arith.subf %9, %11 : vector<256x128xf32>
    %cst_7 = arith.constant 0.000000e+00 : f32
    %13 = vector.broadcast %cst_7 : f32 to vector<256x128xf32>
    %14 = arith.maximumf %12, %13 : vector<256x128xf32>
    %cst_8 = arith.constant 1.000000e+00 : f32
    %15 = vector.broadcast %cst_8 : f32 to vector<256x128xf32>
    %16 = arith.addf %14, %15 : vector<256x128xf32>
    %17 = tpu.reciprocal %16 : vector<256x128xf32> -> vector<256x128xf32>
    %18 = arith.mulf %17, %17 : vector<256x128xf32>
    %19 = arith.mulf %18, %18 : vector<256x128xf32>
    %20 = arith.mulf %19, %19 : vector<256x128xf32>
    %21 = arith.mulf %20, %18 : vector<256x128xf32>
    %c0_9 = arith.constant 0 : index
    %c0_10 = arith.constant 0 : index
    %22 = vector.load %arg4[%c0_9, %c0_10] : memref<1x128xf32, #tpu.memory_space<vmem>>, vector<1x128xf32>
    %23 = vector.broadcast %22 : vector<1x128xf32> to vector<256x128xf32>
    %24 = arith.mulf %21, %23 : vector<256x128xf32>
    %cst_11 = arith.constant dense<0.000000e+00> : vector<256xf32>
    %25 = vector.multi_reduction <add>, %24, %cst_11 [1] : vector<256x128xf32> to vector<256xf32>
    %26 = vector.shape_cast %25 : vector<256xf32> to vector<256x1xf32>
    %27 = tpu.reciprocal %26 : vector<256x1xf32> -> vector<256x1xf32>
    %28 = vector.broadcast %27 : vector<256x1xf32> to vector<256x128xf32>
    %29 = arith.mulf %24, %28 : vector<256x128xf32>
    %c0_12 = arith.constant 0 : index
    %c0_13 = arith.constant 0 : index
    %30 = vector.load %arg5[%c0_12, %c0_13] : memref<256x128xf32, #tpu.memory_space<vmem>>, vector<256x128xf32>
    tpu.vector_store %arg5[%c0_12, %c0_13], %14 {strides = array<i32>} : memref<256x128xf32, #tpu.memory_space<vmem>>, vector<256x128xf32>,
    %c0_14 = arith.constant 0 : index
    %c0_15 = arith.constant 0 : index
    %31 = vector.load %arg6[%c0_14, %c0_15] : memref<256x128xf32, #tpu.memory_space<vmem>>, vector<256x128xf32>
    tpu.vector_store %arg6[%c0_14, %c0_15], %29 {strides = array<i32>} : memref<256x128xf32, #tpu.memory_space<vmem>>, vector<256x128xf32>,
    return
  }
  func.func @transform_0(%arg0: i32) -> (i32, i32) {
    %c0_i32 = arith.constant 0 : i32
    %c0_i32_0 = arith.constant 0 : i32
    return %arg0, %c0_i32 : i32, i32
  }
  func.func @transform_1(%arg0: i32) -> (i32, i32) {
    %c0_i32 = arith.constant 0 : i32
    %c0_i32_0 = arith.constant 0 : i32
    %c0_i32_1 = arith.constant 0 : i32
    return %c0_i32, %c0_i32_0 : i32, i32
  }
  func.func @transform_2(%arg0: i32) -> (i32, i32) {
    %c0_i32 = arith.constant 0 : i32
    %c0_i32_0 = arith.constant 0 : i32
    %c0_i32_1 = arith.constant 0 : i32
    return %c0_i32, %c0_i32_0 : i32, i32
  }
  func.func @transform_3(%arg0: i32) -> (i32, i32) {
    %c0_i32 = arith.constant 0 : i32
    %c0_i32_0 = arith.constant 0 : i32
    %c0_i32_1 = arith.constant 0 : i32
    return %c0_i32, %c0_i32_0 : i32, i32
  }
  func.func @transform_4(%arg0: i32) -> (i32, i32) {
    %c0_i32 = arith.constant 0 : i32
    %c0_i32_0 = arith.constant 0 : i32
    return %arg0, %c0_i32 : i32, i32
  }
  func.func @transform_5(%arg0: i32) -> (i32, i32) {
    %c0_i32 = arith.constant 0 : i32
    %c0_i32_0 = arith.constant 0 : i32
    return %arg0, %c0_i32 : i32, i32
  }
}

</mosaic_0001>

<llo_original>
// kernel: tpu_custom_call.1
$region0: #{tpu_custom_call.1}
  #allocation0 [shape = 'u32[]', space=smem, size = 0x4, offset = 0x4, fixed_abs, tag = 'smem constant byte address 0x4 - core index']
  #allocation1 [shape = 'u32[144,128]{1,0:T(1,128)}', space=vmem, size = 0x12000, scoped, tag = 'internal scratch']
  %s0 = inlined_call_operand.vmem [shape: f32[1024,32], index: 0, kind: input, shape index: {}]
  %s1 = inlined_call_operand.vmem [shape: f32[32,128], index: 1, kind: input, shape index: {}]
  %s2 = inlined_call_operand.vmem [shape: f32[1,128], index: 2, kind: input, shape index: {}]
  %s3 = inlined_call_operand.vmem [shape: f32[1,128], index: 3, kind: input, shape index: {}]
  %s4 = inlined_call_operand.hbm [shape: f32[1024,128], index: 4, kind: output, shape index: {0}]
  %s5 = inlined_call_operand.hbm [shape: f32[1024,128], index: 5, kind: output, shape index: {1}]
  %6 = xla_tuple %s4, %s5
  %s7 = sld [smem:[#allocation0]]
  $region57: #{tpu_custom_call.1} parent=0
    _
  %s9 = ssub.s32 1, %s7
  %s10 = scalar_select 0, %s9, %s7
  $region1: #{tpu_custom_call.1} parent=0
    #allocation2 [shape = 'u8[262144]{0}', space=vmem, size = 0x40000, scoped, tag = 'output window, operand 0']
    #allocation3 [shape = 's32[2]{0}', space=sflag, size = 0x8, scoped, tag = 'scoped memory for tpu_custom_call.1']
    #allocation4 [shape = 'u8[262144]{0}', space=vmem, size = 0x40000, scoped, tag = 'output window, operand 1']
    #allocation5 [shape = 's32[2]{0}', space=sflag, size = 0x8, scoped, tag = 'scoped memory for tpu_custom_call.1']
    %11 = vsyncpa [#allocation3], 0
    %s12 = scalar_lea.sflag [#allocation3], 1
    %13 = vsyncpa %s12, 0
    %14 = vsyncpa [#allocation5], 0
    %s15 = scalar_lea.sflag [#allocation5], 1
    %16 = vsyncpa %s15, 0
    loop: start=0, step=1, limit=6
    $region2: #{tpu_custom_call.1} parent=1 // loop_pre_header
      _
    $region3: #{tpu_custom_call.1} parent=1 // loop_header
      %s18 = sphi 0, %s22
      %p19 = scmp.ge.s32.totalorder %s18, 6
      %s28 = sphi 0, %s30
      %s31 = sphi 0, %s28
      %s32 = sphi 0, %s31
      %s48 = sphi 0, %s32
      %s52 = sphi 0, %s52
      %s54 = sphi 0, %s52
      %s55 = sphi 0, %s54
      %s69 = sphi 0, %s55
      %s73 = sphi 0, %s73
      %s75 = sphi 0, %s73
      %s76 = sphi 0, %s75
      %s90 = sphi 0, %s76
      %s94 = sphi 0, %s94
      %s96 = sphi 0, %s94
      %s97 = sphi 0, %s96
      %s111 = sphi 0, %s97
      %s117 = sphi 0, %s119
      %s120 = sphi 0, %s117
      %s121 = sphi 0, %s120
      %s137 = sphi 0, %s121
      %s143 = sphi 0, %s145
      %s146 = sphi 0, %s143
      %s147 = sphi 0, %s146
      %s163 = sphi 0, %s147
    $region4: #{tpu_custom_call.1} parent=1 // loop_header_branch
      %21 = sbr.rel (%p19) target = $region8
    $region5: #{tpu_custom_call.1} parent=1 // loop_body
      %s23 = ssub.s32 %s18, 1
      %s24 = ssub.s32 %s18, 2
      %s25 = sadd.s32 %s18, 1
      %s26 = ssub.s32 %s18, %s25
      %p27 = scmp.eq.s32.totalorder %s26, 0
      %s29 = sadd.s32 %s28, 1
      %s30 = scalar_select %p27, %s28, %s29
      %p33 = pneg %p27
      %p34 = scmp.eq.s32.totalorder %s18, 3
      %p35 = por %p33, %p34
      %p36 = scmp.ne.s32.totalorder %s28, %s31
      %p37 = scmp.eq.s32.totalorder %s18, 0
      %p38 = por %p36, %p37
      %p39 = scmp.ne.s32.totalorder %s28, %s31
      %p40 = scmp.eq.s32.totalorder %s23, 3
      %p41 = por %p39, %p40
      %p42 = scmp.ne.s32.totalorder %s31, %s32
      %p43 = scmp.eq.s32.totalorder %s23, 0
      %p44 = por %p42, %p43
      %p45 = scmp.ne.s32.totalorder %s31, %s32
      %p46 = scmp.eq.s32.totalorder %s24, 3
      %p47 = por %p45, %p46
      %p49 = scmp.ne.s32.totalorder %s32, %s48
      %p50 = scmp.eq.s32.totalorder %s24, 0
      %p51 = por %p49, %p50
      %s53 = sadd.s32 %s52, 1
      %p56 = scmp.eq.s32.totalorder %s18, 3
      %p57 = scmp.ne.s32.totalorder %s52, %s54
      %p58 = scmp.eq.s32.totalorder %s18, 0
      %p59 = por %p57, %p58
      %p60 = scmp.ne.s32.totalorder %s52, %s54
      %p61 = scmp.eq.s32.totalorder %s23, 3
      %p62 = por %p60, %p61
      %p63 = scmp.ne.s32.totalorder %s54, %s55
      %p64 = scmp.eq.s32.totalorder %s23, 0
      %p65 = por %p63, %p64
      %p66 = scmp.ne.s32.totalorder %s54, %s55
      %p67 = scmp.eq.s32.totalorder %s24, 3
      %p68 = por %p66, %p67
      %p70 = scmp.ne.s32.totalorder %s55, %s69
      %p71 = scmp.eq.s32.totalorder %s24, 0
      %p72 = por %p70, %p71
      %s74 = sadd.s32 %s73, 1
      %p77 = scmp.eq.s32.totalorder %s18, 3
      %p78 = scmp.ne.s32.totalorder %s73, %s75
      %p79 = scmp.eq.s32.totalorder %s18, 0
      %p80 = por %p78, %p79
      %p81 = scmp.ne.s32.totalorder %s73, %s75
      %p82 = scmp.eq.s32.totalorder %s23, 3
      %p83 = por %p81, %p82
      %p84 = scmp.ne.s32.totalorder %s75, %s76
      %p85 = scmp.eq.s32.totalorder %s23, 0
      %p86 = por %p84, %p85
      %p87 = scmp.ne.s32.totalorder %s75, %s76
      %p88 = scmp.eq.s32.totalorder %s24, 3
      %p89 = por %p87, %p88
      %p91 = scmp.ne.s32.totalorder %s76, %s90
      %p92 = scmp.eq.s32.totalorder %s24, 0
      %p93 = por %p91, %p92
      %s95 = sadd.s32 %s94, 1
      %p98 = scmp.eq.s32.totalorder %s18, 3
      %p99 = scmp.ne.s32.totalorder %s94, %s96
      %p100 = scmp.eq.s32.totalorder %s18, 0
      %p101 = por %p99, %p100
      %p102 = scmp.ne.s32.totalorder %s94, %s96
      %p103 = scmp.eq.s32.totalorder %s23, 3
      %p104 = por %p102, %p103
      %p105 = scmp.ne.s32.totalorder %s96, %s97
      %p106 = scmp.eq.s32.totalorder %s23, 0
      %p107 = por %p105, %p106
      %p108 = scmp.ne.s32.totalorder %s96, %s97
      %p109 = scmp.eq.s32.totalorder %s24, 3
      %p110 = por %p108, %p109
      %p112 = scmp.ne.s32.totalorder %s97, %s111
      %p113 = scmp.eq.s32.totalorder %s24, 0
      %p114 = por %p112, %p113
      %s115 = ssub.s32 %s18, %s25
      %p116 = scmp.eq.s32.totalorder %s115, 0
      %s118 = sadd.s32 %s117, 1
      %s119 = scalar_select %p116, %s117, %s118
      %p122 = pneg %p116
      %p123 = scmp.eq.s32.totalorder %s18, 3
      %p124 = por %p122, %p123
      %p125 = scmp.ne.s32.totalorder %s117, %s120
      %p126 = scmp.eq.s32.totalorder %s18, 0
      %p127 = por %p125, %p126
      %p128 = scmp.ne.s32.totalorder %s117, %s120
      %p129 = scmp.eq.s32.totalorder %s23, 3
      %p130 = por %p128, %p129
      %p131 = scmp.ne.s32.totalorder %s120, %s121
      %p132 = scmp.eq.s32.totalorder %s23, 0
      %p133 = por %p131, %p132
      %p134 = scmp.ne.s32.totalorder %s120, %s121
      %p135 = scmp.eq.s32.totalorder %s24, 3
      %p136 = por %p134, %p135
      %p138 = scmp.ne.s32.totalorder %s121, %s137
      %p139 = scmp.eq.s32.totalorder %s24, 0
      %p140 = por %p138, %p139
      %s141 = ssub.s32 %s18, %s25
      %p142 = scmp.eq.s32.totalorder %s141, 0
      %s144 = sadd.s32 %s143, 1
      %s145 = scalar_select %p142, %s143, %s144
      %p148 = pneg %p142
      %p149 = scmp.eq.s32.totalorder %s18, 3
      %p150 = por %p148, %p149
      %p151 = scmp.ne.s32.totalorder %s143, %s146
      %p152 = scmp.eq.s32.totalorder %s18, 0
      %p153 = por %p151, %p152
      %p154 = scmp.ne.s32.totalorder %s143, %s146
      %p155 = scmp.eq.s32.totalorder %s23, 3
      %p156 = por %p154, %p155
      %p157 = scmp.ne.s32.totalorder %s146, %s147
      %p158 = scmp.eq.s32.totalorder %s23, 0
      %p159 = por %p157, %p158
      %p160 = scmp.ne.s32.totalorder %s146, %s147
      %p161 = scmp.eq.s32.totalorder %s24, 3
      %p162 = por %p160, %p161
      %p164 = scmp.ne.s32.totalorder %s147, %s163
      %p165 = scmp.eq.s32.totalorder %s24, 0
      %p166 = por %p164, %p165
      %p167 = scmp.le.s32.totalorder 1, %s18
      %p168 = scmp.lt.s32.totalorder %s18, 5
      %p169 = pnand %p167, %p168
      %p170 = pneg %p169
      // Predicated region
      $region9: #{tpu_custom_call.1} parent=5 // pred_check
        _
      $region10: #{tpu_custom_call.1} parent=5 // pred_check_branch
        %172 = sbr.rel (%p169) target = $region12
      $region11: #{tpu_custom_call.1} parent=5 // pred_region
        %s173 = ssub.s32 %s18, 1
        // Predicated region
        $region13: #{tpu_custom_call.1} parent=11 // pred_check
          %p174 = pneg %p65
        $region14: #{tpu_custom_call.1} parent=11 // pred_check_branch
          %176 = sbr.rel (%p174) target = $region16
        $region15: #{tpu_custom_call.1} parent=11 // pred_region
          _
        $region16: #{tpu_custom_call.1} parent=11 // pred_fallthru
          _
        // Predicated region
        $region17: #{tpu_custom_call.1} parent=11 // pred_check
          %p177 = pneg %p86
        $region18: #{tpu_custom_call.1} parent=11 // pred_check_branch
          %179 = sbr.rel (%p177) target = $region20
        $region19: #{tpu_custom_call.1} parent=11 // pred_region
          _
        $region20: #{tpu_custom_call.1} parent=11 // pred_fallthru
          _
        // Predicated region
        $region21: #{tpu_custom_call.1} parent=11 // pred_check
          %p180 = pneg %p107
        $region22: #{tpu_custom_call.1} parent=11 // pred_check_branch
          %182 = sbr.rel (%p180) target = $region24
        $region23: #{tpu_custom_call.1} parent=11 // pred_region
          _
        $region24: #{tpu_custom_call.1} parent=11 // pred_fallthru
          _
      $region12: #{tpu_custom_call.1} parent=5 // pred_fallthru
        _
      %p183 = scmp.lt.s32.totalorder %s18, 4
      // Predicated region
      $region25: #{tpu_custom_call.1} parent=5 // pred_check
        %p184 = pneg %p183
      $region26: #{tpu_custom_call.1} parent=5 // pred_check_branch
        %186 = sbr.rel (%p184) target = $region28
      $region27: #{tpu_custom_call.1} parent=5 // pred_region
        // Predicated region
        $region29: #{tpu_custom_call.1} parent=27 // pred_check
          %p187 = pneg %p38
        $region30: #{tpu_custom_call.1} parent=27 // pred_check_branch
          %189 = sbr.rel (%p187) target = $region32
        $region31: #{tpu_custom_call.1} parent=27 // pred_region
          %s190 = smul.u32 32, %s18
          %p191 = scmp.lt.s32.totalorder %s190, 127
          %s192 = scalar_select %p191, %s190, 127
          %s193 = smul.addr %s192, 8
          %s194 = scalar_lea.vmem %s0, %s193
          %s195 = smul.u32 32, %s18
        $region32: #{tpu_custom_call.1} parent=27 // pred_fallthru
          _
      $region28: #{tpu_custom_call.1} parent=5 // pred_fallthru
        _
      %p196 = scmp.le.s32.totalorder 1, %s18
      %p197 = scmp.lt.s32.totalorder %s18, 5
      %p198 = pnand %p196, %p197
      %p199 = pneg %p198
      // Predicated region
      $region33: #{tpu_custom_call.1} parent=5 // pred_check
        _
      $region34: #{tpu_custom_call.1} parent=5 // pred_check_branch
        %201 = sbr.rel (%p198) target = $region36
      $region35: #{tpu_custom_call.1} parent=5 // pred_region
        %s202 = ssub.s32 %s18, 1
        %s203 = smul.u32 32, %s23
        %p204 = scmp.lt.s32.totalorder %s203, 127
        %s205 = scalar_select %p204, %s203, 127
        %s206 = smul.addr %s205, 8
        %s207 = scalar_lea.vmem %s0, %s206
        %p208 = pneg %p44
        %p209 = pneg %p41
        %p210 = pneg %p65
        %p211 = pneg %p62
        %p212 = pneg %p86
        %p213 = pneg %p83
        %p214 = pneg %p107
        %p215 = pneg %p104
        %p216 = pneg %p133
        %p217 = pneg %p130
        %s218 = sand.u32 %s120, 1
        %s219 = scalar_lea.sflag [#allocation3], %s218
        %s220 = sand.u32 %s120, 1
        %s221 = smul.addr %s220, 256
        %s222 = scalar_lea.vmem [#allocation2], %s221
        %p223 = pneg %p159
        %p224 = pneg %p156
        %s225 = sand.u32 %s146, 1
        %s226 = scalar_lea.sflag [#allocation5], %s225
        %s227 = sand.u32 %s146, 1
        %s228 = smul.addr %s227, 256
        %s229 = scalar_lea.vmem [#allocation4], %s228
        %s230 = smul.u32 32, %s23
        %p231 = scmp.lt.s32.totalorder %s230, 127
        %s232 = scalar_select %p231, %s230, 127
        %s233 = smul.addr %s232, 8
        %s234 = scalar_lea.vmem %s0, %s233
        %s235 = smul.u32 32, %s23
        %s236 = smul.u32 32, %s23
        %s237 = smul.u32 32, %s23
        %v238 = vld [vmem:[%s234] sm:$0xff]
        %v239 = vld [vmem:[%s234 + $0x8] sm:$0xff]
        %v240 = vld [vmem:[%s234 + $0x10] sm:$0xff]
        %v241 = vld [vmem:[%s234 + $0x18] sm:$0xff]
        %v242 = vld [vmem:[%s234 + $0x20] sm:$0xff]
        %v243 = vld [vmem:[%s234 + $0x28] sm:$0xff]
        %v244 = vld [vmem:[%s234 + $0x30] sm:$0xff]
        %v245 = vld [vmem:[%s234 + $0x38] sm:$0xff]
        %v246 = vld [vmem:[%s234 + $0x40] sm:$0xff]
        %v247 = vld [vmem:[%s234 + $0x48] sm:$0xff]
        %v248 = vld [vmem:[%s234 + $0x50] sm:$0xff]
        %v249 = vld [vmem:[%s234 + $0x58] sm:$0xff]
        %v250 = vld [vmem:[%s234 + $0x60] sm:$0xff]
        %v251 = vld [vmem:[%s234 + $0x68] sm:$0xff]
        %v252 = vld [vmem:[%s234 + $0x70] sm:$0xff]
        %v253 = vld [vmem:[%s234 + $0x78] sm:$0xff]
        %v254 = vld [vmem:[%s234 + $0x80] sm:$0xff]
        %v255 = vld [vmem:[%s234 + $0x88] sm:$0xff]
        %v256 = vld [vmem:[%s234 + $0x90] sm:$0xff]
        %v257 = vld [vmem:[%s234 + $0x98] sm:$0xff]
        %v258 = vld [vmem:[%s234 + $0xa0] sm:$0xff]
        %v259 = vld [vmem:[%s234 + $0xa8] sm:$0xff]
        %v260 = vld [vmem:[%s234 + $0xb0] sm:$0xff]
        %v261 = vld [vmem:[%s234 + $0xb8] sm:$0xff]
        %v262 = vld [vmem:[%s234 + $0xc0] sm:$0xff]
        %v263 = vld [vmem:[%s234 + $0xc8] sm:$0xff]
        %v264 = vld [vmem:[%s234 + $0xd0] sm:$0xff]
        %v265 = vld [vmem:[%s234 + $0xd8] sm:$0xff]
        %v266 = vld [vmem:[%s234 + $0xe0] sm:$0xff]
        %v267 = vld [vmem:[%s234 + $0xe8] sm:$0xff]
        %v268 = vld [vmem:[%s234 + $0xf0] sm:$0xff]
        %v269 = vld [vmem:[%s234 + $0xf8] sm:$0xff]
        %v270 = vmul.f32 %v238, %v238
        %v271 = vmul.f32 %v239, %v239
        %v272 = vmul.f32 %v240, %v240
        %v273 = vmul.f32 %v241, %v241
        %v274 = vmul.f32 %v242, %v242
        %v275 = vmul.f32 %v243, %v243
        %v276 = vmul.f32 %v244, %v244
        %v277 = vmul.f32 %v245, %v245
        %v278 = vmul.f32 %v246, %v246
        %v279 = vmul.f32 %v247, %v247
        %v280 = vmul.f32 %v248, %v248
        %v281 = vmul.f32 %v249, %v249
        %v282 = vmul.f32 %v250, %v250
        %v283 = vmul.f32 %v251, %v251
        %v284 = vmul.f32 %v252, %v252
        %v285 = vmul.f32 %v253, %v253
        %v286 = vmul.f32 %v254, %v254
        %v287 = vmul.f32 %v255, %v255
        %v288 = vmul.f32 %v256, %v256
        %v289 = vmul.f32 %v257, %v257
        %v290 = vmul.f32 %v258, %v258
        %v291 = vmul.f32 %v259, %v259
        %v292 = vmul.f32 %v260, %v260
        %v293 = vmul.f32 %v261, %v261
        %v294 = vmul.f32 %v262, %v262
        %v295 = vmul.f32 %v263, %v263
        %v296 = vmul.f32 %v264, %v264
        %v297 = vmul.f32 %v265, %v265
        %v298 = vmul.f32 %v266, %v266
        %v299 = vmul.f32 %v267, %v267
        %v300 = vmul.f32 %v268, %v268
        %v301 = vmul.f32 %v269, %v269
        %vm302 = vcmask 261120
        %v303 = vsel %vm302, %v270, 0.0
        %304 = vadd.xlane.f32.xlu0 %v303
        %v305 = vpop.xlane.xlu0 %304
        %v306 = vsel %vm302, %v271, 0.0
        %307 = vadd.xlane.f32.xlu0 %v306
        %v308 = vpop.xlane.xlu0 %307
        %v309 = vsel %vm302, %v272, 0.0
        %310 = vadd.xlane.f32.xlu0 %v309
        %v311 = vpop.xlane.xlu0 %310
        %v312 = vsel %vm302, %v273, 0.0
        %313 = vadd.xlane.f32.xlu0 %v312
        %v314 = vpop.xlane.xlu0 %313
        %v315 = vsel %vm302, %v274, 0.0
        %316 = vadd.xlane.f32.xlu0 %v315
        %v317 = vpop.xlane.xlu0 %316
        %v318 = vsel %vm302, %v275, 0.0
        %319 = vadd.xlane.f32.xlu0 %v318
        %v320 = vpop.xlane.xlu0 %319
        %v321 = vsel %vm302, %v276, 0.0
        %322 = vadd.xlane.f32.xlu0 %v321
        %v323 = vpop.xlane.xlu0 %322
        %v324 = vsel %vm302, %v277, 0.0
        %325 = vadd.xlane.f32.xlu0 %v324
        %v326 = vpop.xlane.xlu0 %325
        %v327 = vsel %vm302, %v278, 0.0
        %328 = vadd.xlane.f32.xlu0 %v327
        %v329 = vpop.xlane.xlu0 %328
        %v330 = vsel %vm302, %v279, 0.0
        %331 = vadd.xlane.f32.xlu0 %v330
        %v332 = vpop.xlane.xlu0 %331
        %v333 = vsel %vm302, %v280, 0.0
        %334 = vadd.xlane.f32.xlu0 %v333
        %v335 = vpop.xlane.xlu0 %334
        %v336 = vsel %vm302, %v281, 0.0
        %337 = vadd.xlane.f32.xlu0 %v336
        %v338 = vpop.xlane.xlu0 %337
        %v339 = vsel %vm302, %v282, 0.0
        %340 = vadd.xlane.f32.xlu0 %v339
        %v341 = vpop.xlane.xlu0 %340
        %v342 = vsel %vm302, %v283, 0.0
        %343 = vadd.xlane.f32.xlu0 %v342
        %v344 = vpop.xlane.xlu0 %343
        %v345 = vsel %vm302, %v284, 0.0
        %346 = vadd.xlane.f32.xlu0 %v345
        %v347 = vpop.xlane.xlu0 %346
        %v348 = vsel %vm302, %v285, 0.0
        %349 = vadd.xlane.f32.xlu0 %v348
        %v350 = vpop.xlane.xlu0 %349
        %v351 = vsel %vm302, %v286, 0.0
        %352 = vadd.xlane.f32.xlu0 %v351
        %v353 = vpop.xlane.xlu0 %352
        %v354 = vsel %vm302, %v287, 0.0
        %355 = vadd.xlane.f32.xlu0 %v354
        %v356 = vpop.xlane.xlu0 %355
        %v357 = vsel %vm302, %v288, 0.0
        %358 = vadd.xlane.f32.xlu0 %v357
        %v359 = vpop.xlane.xlu0 %358
        %v360 = vsel %vm302, %v289, 0.0
        %361 = vadd.xlane.f32.xlu0 %v360
        %v362 = vpop.xlane.xlu0 %361
        %v363 = vsel %vm302, %v290, 0.0
        %364 = vadd.xlane.f32.xlu0 %v363
        %v365 = vpop.xlane.xlu0 %364
        %v366 = vsel %vm302, %v291, 0.0
        %367 = vadd.xlane.f32.xlu0 %v366
        %v368 = vpop.xlane.xlu0 %367
        %v369 = vsel %vm302, %v292, 0.0
        %370 = vadd.xlane.f32.xlu0 %v369
        %v371 = vpop.xlane.xlu0 %370
        %v372 = vsel %vm302, %v293, 0.0
        %373 = vadd.xlane.f32.xlu0 %v372
        %v374 = vpop.xlane.xlu0 %373
        %v375 = vsel %vm302, %v294, 0.0
        %376 = vadd.xlane.f32.xlu0 %v375
        %v377 = vpop.xlane.xlu0 %376
        %v378 = vsel %vm302, %v295, 0.0
        %379 = vadd.xlane.f32.xlu0 %v378
        %v380 = vpop.xlane.xlu0 %379
        %v381 = vsel %vm302, %v296, 0.0
        %382 = vadd.xlane.f32.xlu0 %v381
        %v383 = vpop.xlane.xlu0 %382
        %v384 = vsel %vm302, %v297, 0.0
        %385 = vadd.xlane.f32.xlu0 %v384
        %v386 = vpop.xlane.xlu0 %385
        %v387 = vsel %vm302, %v298, 0.0
        %388 = vadd.xlane.f32.xlu0 %v387
        %v389 = vpop.xlane.xlu0 %388
        %v390 = vsel %vm302, %v299, 0.0
        %391 = vadd.xlane.f32.xlu0 %v390
        %v392 = vpop.xlane.xlu0 %391
        %v393 = vsel %vm302, %v300, 0.0
        %394 = vadd.xlane.f32.xlu0 %v393
        %v395 = vpop.xlane.xlu0 %394
        %v396 = vsel %vm302, %v301, 0.0
        %397 = vadd.xlane.f32.xlu0 %v396
        %v398 = vpop.xlane.xlu0 %397
        %v399 = vld [vmem:[%s1] sm:$0xff]
        %v400 = vld [vmem:[%s1 + $0x8] sm:$0xff]
        %v401 = vld [vmem:[%s1 + $0x10] sm:$0xff]
        %v402 = vld [vmem:[%s1 + $0x18] sm:$0xff]
        %v404 = vsel %vm302, %v238, 0
        %v407 = vsel %vm302, %v239, 0
        %v410 = vsel %vm302, %v240, 0
        %v413 = vsel %vm302, %v241, 0
        %v416 = vsel %vm302, %v242, 0
        %v419 = vsel %vm302, %v243, 0
        %v422 = vsel %vm302, %v244, 0
        %v425 = vsel %vm302, %v245, 0
        %v428 = vsel %vm302, %v246, 0
        %v431 = vsel %vm302, %v247, 0
        %v434 = vsel %vm302, %v248, 0
        %v437 = vsel %vm302, %v249, 0
        %v440 = vsel %vm302, %v250, 0
        %v443 = vsel %vm302, %v251, 0
        %v446 = vsel %vm302, %v252, 0
        %v449 = vsel %vm302, %v253, 0
        %v452 = vsel %vm302, %v254, 0
        %v455 = vsel %vm302, %v255, 0
        %v458 = vsel %vm302, %v256, 0
        %v461 = vsel %vm302, %v257, 0
        %v464 = vsel %vm302, %v258, 0
        %v467 = vsel %vm302, %v259, 0
        %v470 = vsel %vm302, %v260, 0
        %v473 = vsel %vm302, %v261, 0
        %v476 = vsel %vm302, %v262, 0
        %v479 = vsel %vm302, %v263, 0
        %v482 = vsel %vm302, %v264, 0
        %v485 = vsel %vm302, %v265, 0
        %v488 = vsel %vm302, %v266, 0
        %v491 = vsel %vm302, %v267, 0
        %v494 = vsel %vm302, %v268, 0
        %v497 = vsel %vm302, %v269, 0
        %499 = vmatprep.subr.mxu0 0.0
        %500 = vmatpush1.msra.mxu0 0.0
        %501 = vmatprep.subr.mxu0 0.0
        %502 = vmatpush1.msra.mxu0 0.0
        %503 = vmatprep.subr.mxu0 0.0
        %504 = vmatpush1.msra.mxu0 0.0
        %505 = vmatprep.subr.mxu0 0.0
        %506 = vmatpush1.msra.mxu0 0.0
        %507 = vmatprep.subr.mxu0 0.0
        %508 = vmatpush1.msra.mxu0 0.0
        %509 = vmatprep.subr.mxu0 0.0
        %510 = vmatpush1.msra.mxu0 0.0
        %511 = vmatprep.subr.mxu0 0.0
        %512 = vmatpush1.msra.mxu0 0.0
        %513 = vmatprep.subr.mxu0 0.0
        %514 = vmatpush1.msra.mxu0 0.0
        %515 = vmatprep.subr.mxu0 0.0
        %516 = vmatpush1.msra.mxu0 0.0
        %517 = vmatprep.subr.mxu0 0.0
        %518 = vmatpush1.msra.mxu0 0.0
        %519 = vmatprep.subr.mxu0 0.0
        %520 = vmatpush1.msra.mxu0 0.0
        %521 = vmatprep.subr.mxu0 0.0
        %522 = vmatpush1.msra.mxu0 0.0
        %523 = vmatprep.subr.mxu0 0.0
        %524 = vmatpush1.msra.mxu0 %v402
        %525 = vmatprep.subr.mxu0 0.0
        %526 = vmatpush1.msra.mxu0 %v401
        %527 = vmatprep.subr.mxu0 0.0
        %528 = vmatpush1.msra.mxu0 %v400
        %529 = vmatprep.subr.mxu0 0.0
        %530 = vmatpush1.msra.mxu0 %v399
        %531 = vmatprep.subr.mxu0 0.0
        %532 = vmatpush2.msra.mxu0 0.0
        %533 = vmatprep.subr.mxu0 0.0
        %534 = vmatpush2.msra.mxu0 0.0
        %535 = vmatprep.subr.mxu0 0.0
        %536 = vmatpush2.msra.mxu0 0.0
        %537 = vmatprep.subr.mxu0 0.0
        %538 = vmatpush2.msra.mxu0 0.0
        %539 = vmatprep.subr.mxu0 0.0
        %540 = vmatpush2.msra.mxu0 0.0
        %541 = vmatprep.subr.mxu0 0.0
        %542 = vmatpush2.msra.mxu0 0.0
        %543 = vmatprep.subr.mxu0 0.0
        %544 = vmatpush2.msra.mxu0 0.0
        %545 = vmatprep.subr.mxu0 0.0
        %546 = vmatpush2.msra.mxu0 0.0
        %547 = vmatprep.subr.mxu0 0.0
        %548 = vmatpush2.msra.mxu0 0.0
        %549 = vmatprep.subr.mxu0 0.0
        %550 = vmatpush2.msra.mxu0 0.0
        %551 = vmatprep.subr.mxu0 0.0
        %552 = vmatpush2.msra.mxu0 0.0
        %553 = vmatprep.subr.mxu0 0.0
        %554 = vmatpush2.msra.mxu0 0.0
        %555 = vmatprep.subr.mxu0 0.0
        %556 = vmatpush2.msra.mxu0 0.0
        %557 = vmatprep.subr.mxu0 0.0
        %558 = vmatpush2.msra.mxu0 0.0
        %559 = vmatprep.subr.mxu0 0.0
        %560 = vmatpush2.msra.mxu0 0.0
        %561 = vmatprep.subr.mxu0 0.0
        %562 = vmatpush2.msra.mxu0 0.0
        %563 = vmatprep.mubr.f32.mxu0 0.0
        %564 = vmatmul.mubr.f32.gmra.mxu0 %v404
        %v565 = vpop.f32.mrf.mxu0
        %v566 = vadd.f32 0.0, %v565
        %v567 = vpop.f32.mrf.mxu0
        %568 = vmatprep.mubr.f32.mxu0 0.0
        %569 = vmatmul.mubr.f32.gmra.mxu0 %v407
        %v570 = vpop.f32.mrf.mxu0
        %v571 = vadd.f32 0.0, %v570
        %v572 = vpop.f32.mrf.mxu0
        %573 = vmatprep.mubr.f32.mxu0 0.0
        %574 = vmatmul.mubr.f32.gmra.mxu0 %v410
        %v575 = vpop.f32.mrf.mxu0
        %v576 = vadd.f32 0.0, %v575
        %v577 = vpop.f32.mrf.mxu0
        %578 = vmatprep.mubr.f32.mxu0 0.0
        %579 = vmatmul.mubr.f32.gmra.mxu0 %v413
        %v580 = vpop.f32.mrf.mxu0
        %v581 = vadd.f32 0.0, %v580
        %v582 = vpop.f32.mrf.mxu0
        %583 = vmatprep.mubr.f32.mxu0 0.0
        %584 = vmatmul.mubr.f32.gmra.mxu0 %v416
        %v585 = vpop.f32.mrf.mxu0
        %v586 = vadd.f32 0.0, %v585
        %v587 = vpop.f32.mrf.mxu0
        %588 = vmatprep.mubr.f32.mxu0 0.0
        %589 = vmatmul.mubr.f32.gmra.mxu0 %v419
        %v590 = vpop.f32.mrf.mxu0
        %v591 = vadd.f32 0.0, %v590
        %v592 = vpop.f32.mrf.mxu0
        %593 = vmatprep.mubr.f32.mxu0 0.0
        %594 = vmatmul.mubr.f32.gmra.mxu0 %v422
        %v595 = vpop.f32.mrf.mxu0
        %v596 = vadd.f32 0.0, %v595
        %v597 = vpop.f32.mrf.mxu0
        %598 = vmatprep.mubr.f32.mxu0 0.0
        %599 = vmatmul.mubr.f32.gmra.mxu0 %v425
        %v600 = vpop.f32.mrf.mxu0
        %v601 = vadd.f32 0.0, %v600
        %v602 = vpop.f32.mrf.mxu0
        %603 = vmatprep.mubr.f32.mxu0 0.0
        %604 = vmatmul.mubr.f32.gmra.mxu0 %v428
        %v605 = vpop.f32.mrf.mxu0
        %v606 = vadd.f32 0.0, %v605
        %v607 = vpop.f32.mrf.mxu0
        %608 = vmatprep.mubr.f32.mxu0 0.0
        %609 = vmatmul.mubr.f32.gmra.mxu0 %v431
        %v610 = vpop.f32.mrf.mxu0
        %v611 = vadd.f32 0.0, %v610
        %v612 = vpop.f32.mrf.mxu0
        %613 = vmatprep.mubr.f32.mxu0 0.0
        %614 = vmatmul.mubr.f32.gmra.mxu0 %v434
        %v615 = vpop.f32.mrf.mxu0
        %v616 = vadd.f32 0.0, %v615
        %v617 = vpop.f32.mrf.mxu0
        %618 = vmatprep.mubr.f32.mxu0 0.0
        %619 = vmatmul.mubr.f32.gmra.mxu0 %v437
        %v620 = vpop.f32.mrf.mxu0
        %v621 = vadd.f32 0.0, %v620
        %v622 = vpop.f32.mrf.mxu0
        %623 = vmatprep.mubr.f32.mxu0 0.0
        %624 = vmatmul.mubr.f32.gmra.mxu0 %v440
        %v625 = vpop.f32.mrf.mxu0
        %v626 = vadd.f32 0.0, %v625
        %v627 = vpop.f32.mrf.mxu0
        %628 = vmatprep.mubr.f32.mxu0 0.0
        %629 = vmatmul.mubr.f32.gmra.mxu0 %v443
        %v630 = vpop.f32.mrf.mxu0
        %v631 = vadd.f32 0.0, %v630
        %v632 = vpop.f32.mrf.mxu0
        %633 = vmatprep.mubr.f32.mxu0 0.0
        %634 = vmatmul.mubr.f32.gmra.mxu0 %v446
        %v635 = vpop.f32.mrf.mxu0
        %v636 = vadd.f32 0.0, %v635
        %v637 = vpop.f32.mrf.mxu0
        %638 = vmatprep.mubr.f32.mxu0 0.0
        %639 = vmatmul.mubr.f32.gmra.mxu0 %v449
        %v640 = vpop.f32.mrf.mxu0
        %v641 = vadd.f32 0.0, %v640
        %v642 = vpop.f32.mrf.mxu0
        %643 = vmatprep.mubr.f32.mxu0 0.0
        %644 = vmatmul.mubr.f32.gmra.mxu0 %v452
        %v645 = vpop.f32.mrf.mxu0
        %v646 = vadd.f32 0.0, %v645
        %v647 = vpop.f32.mrf.mxu0
        %648 = vmatprep.mubr.f32.mxu0 0.0
        %649 = vmatmul.mubr.f32.gmra.mxu0 %v455
        %v650 = vpop.f32.mrf.mxu0
        %v651 = vadd.f32 0.0, %v650
        %v652 = vpop.f32.mrf.mxu0
        %653 = vmatprep.mubr.f32.mxu0 0.0
        %654 = vmatmul.mubr.f32.gmra.mxu0 %v458
        %v655 = vpop.f32.mrf.mxu0
        %v656 = vadd.f32 0.0, %v655
        %v657 = vpop.f32.mrf.mxu0
        %658 = vmatprep.mubr.f32.mxu0 0.0
        %659 = vmatmul.mubr.f32.gmra.mxu0 %v461
        %v660 = vpop.f32.mrf.mxu0
        %v661 = vadd.f32 0.0, %v660
        %v662 = vpop.f32.mrf.mxu0
        %663 = vmatprep.mubr.f32.mxu0 0.0
        %664 = vmatmul.mubr.f32.gmra.mxu0 %v464
        %v665 = vpop.f32.mrf.mxu0
        %v666 = vadd.f32 0.0, %v665
        %v667 = vpop.f32.mrf.mxu0
        %668 = vmatprep.mubr.f32.mxu0 0.0
        %669 = vmatmul.mubr.f32.gmra.mxu0 %v467
        %v670 = vpop.f32.mrf.mxu0
        %v671 = vadd.f32 0.0, %v670
        %v672 = vpop.f32.mrf.mxu0
        %673 = vmatprep.mubr.f32.mxu0 0.0
        %674 = vmatmul.mubr.f32.gmra.mxu0 %v470
        %v675 = vpop.f32.mrf.mxu0
        %v676 = vadd.f32 0.0, %v675
        %v677 = vpop.f32.mrf.mxu0
        %678 = vmatprep.mubr.f32.mxu0 0.0
        %679 = vmatmul.mubr.f32.gmra.mxu0 %v473
        %v680 = vpop.f32.mrf.mxu0
        %v681 = vadd.f32 0.0, %v680
        %v682 = vpop.f32.mrf.mxu0
        %683 = vmatprep.mubr.f32.mxu0 0.0
        %684 = vmatmul.mubr.f32.gmra.mxu0 %v476
        %v685 = vpop.f32.mrf.mxu0
        %v686 = vadd.f32 0.0, %v685
        %v687 = vpop.f32.mrf.mxu0
        %688 = vmatprep.mubr.f32.mxu0 0.0
        %689 = vmatmul.mubr.f32.gmra.mxu0 %v479
        %v690 = vpop.f32.mrf.mxu0
        %v691 = vadd.f32 0.0, %v690
        %v692 = vpop.f32.mrf.mxu0
        %693 = vmatprep.mubr.f32.mxu0 0.0
        %694 = vmatmul.mubr.f32.gmra.mxu0 %v482
        %v695 = vpop.f32.mrf.mxu0
        %v696 = vadd.f32 0.0, %v695
        %v697 = vpop.f32.mrf.mxu0
        %698 = vmatprep.mubr.f32.mxu0 0.0
        %699 = vmatmul.mubr.f32.gmra.mxu0 %v485
        %v700 = vpop.f32.mrf.mxu0
        %v701 = vadd.f32 0.0, %v700
        %v702 = vpop.f32.mrf.mxu0
        %703 = vmatprep.mubr.f32.mxu0 0.0
        %704 = vmatmul.mubr.f32.gmra.mxu0 %v488
        %v705 = vpop.f32.mrf.mxu0
        %v706 = vadd.f32 0.0, %v705
        %v707 = vpop.f32.mrf.mxu0
        %708 = vmatprep.mubr.f32.mxu0 0.0
        %709 = vmatmul.mubr.f32.gmra.mxu0 %v491
        %v710 = vpop.f32.mrf.mxu0
        %v711 = vadd.f32 0.0, %v710
        %v712 = vpop.f32.mrf.mxu0
        %713 = vmatprep.mubr.f32.mxu0 0.0
        %714 = vmatmul.mubr.f32.gmra.mxu0 %v494
        %v715 = vpop.f32.mrf.mxu0
        %v716 = vadd.f32 0.0, %v715
        %v717 = vpop.f32.mrf.mxu0
        %718 = vmatprep.mubr.f32.mxu0 0.0
        %719 = vmatmul.mubr.f32.gmra.mxu0 %v497
        %v720 = vpop.f32.mrf.mxu0
        %v721 = vadd.f32 0.0, %v720
        %v722 = vpop.f32.mrf.mxu0
        %723 = vdwg.mxu0
        %v724 = vld [vmem:[%s2] sm:$0x1]
        %v726 = vlaneseq
        %v727 = vshrl.u32 %v726, 7
        %v728 = vsub.s32 0, %v727
        %v729 = vrot.slane %v724, %v728
        %v731 = vadd.f32 %v305, %v729
        %v732 = vadd.f32 %v308, %v729
        %v733 = vadd.f32 %v311, %v729
        %v734 = vadd.f32 %v314, %v729
        %v735 = vadd.f32 %v317, %v729
        %v736 = vadd.f32 %v320, %v729
        %v737 = vadd.f32 %v323, %v729
        %v738 = vadd.f32 %v326, %v729
        %v739 = vadd.f32 %v329, %v729
        %v740 = vadd.f32 %v332, %v729
        %v741 = vadd.f32 %v335, %v729
        %v742 = vadd.f32 %v338, %v729
        %v743 = vadd.f32 %v341, %v729
        %v744 = vadd.f32 %v344, %v729
        %v745 = vadd.f32 %v347, %v729
        %v746 = vadd.f32 %v350, %v729
        %v747 = vadd.f32 %v353, %v729
        %v748 = vadd.f32 %v356, %v729
        %v749 = vadd.f32 %v359, %v729
        %v750 = vadd.f32 %v362, %v729
        %v751 = vadd.f32 %v365, %v729
        %v752 = vadd.f32 %v368, %v729
        %v753 = vadd.f32 %v371, %v729
        %v754 = vadd.f32 %v374, %v729
        %v755 = vadd.f32 %v377, %v729
        %v756 = vadd.f32 %v380, %v729
        %v757 = vadd.f32 %v383, %v729
        %v758 = vadd.f32 %v386, %v729
        %v759 = vadd.f32 %v389, %v729
        %v760 = vadd.f32 %v392, %v729
        %v761 = vadd.f32 %v395, %v729
        %v762 = vadd.f32 %v398, %v729
        %v763 = vmul.f32 %v566, 2.0
        %v764 = vmul.f32 %v571, 2.0
        %v765 = vmul.f32 %v576, 2.0
        %v766 = vmul.f32 %v581, 2.0
        %v767 = vmul.f32 %v586, 2.0
        %v768 = vmul.f32 %v591, 2.0
        %v769 = vmul.f32 %v596, 2.0
        %v770 = vmul.f32 %v601, 2.0
        %v771 = vmul.f32 %v606, 2.0
        %v772 = vmul.f32 %v611, 2.0
        %v773 = vmul.f32 %v616, 2.0
        %v774 = vmul.f32 %v621, 2.0
        %v775 = vmul.f32 %v626, 2.0
        %v776 = vmul.f32 %v631, 2.0
        %v777 = vmul.f32 %v636, 2.0
        %v778 = vmul.f32 %v641, 2.0
        %v779 = vmul.f32 %v646, 2.0
        %v780 = vmul.f32 %v651, 2.0
        %v781 = vmul.f32 %v656, 2.0
        %v782 = vmul.f32 %v661, 2.0
        %v783 = vmul.f32 %v666, 2.0
        %v784 = vmul.f32 %v671, 2.0
        %v785 = vmul.f32 %v676, 2.0
        %v786 = vmul.f32 %v681, 2.0
        %v787 = vmul.f32 %v686, 2.0
        %v788 = vmul.f32 %v691, 2.0
        %v789 = vmul.f32 %v696, 2.0
        %v790 = vmul.f32 %v701, 2.0
        %v791 = vmul.f32 %v706, 2.0
        %v792 = vmul.f32 %v711, 2.0
        %v793 = vmul.f32 %v716, 2.0
        %v794 = vmul.f32 %v721, 2.0
        %v795 = vsub.f32 %v731, %v763
        %v796 = vsub.f32 %v732, %v764
        %v797 = vsub.f32 %v733, %v765
        %v798 = vsub.f32 %v734, %v766
        %v799 = vsub.f32 %v735, %v767
        %v800 = vsub.f32 %v736, %v768
        %v801 = vsub.f32 %v737, %v769
        %v802 = vsub.f32 %v738, %v770
        %v803 = vsub.f32 %v739, %v771
        %v804 = vsub.f32 %v740, %v772
        %v805 = vsub.f32 %v741, %v773
        %v806 = vsub.f32 %v742, %v774
        %v807 = vsub.f32 %v743, %v775
        %v808 = vsub.f32 %v744, %v776
        %v809 = vsub.f32 %v745, %v777
        %v810 = vsub.f32 %v746, %v778
        %v811 = vsub.f32 %v747, %v779
        %v812 = vsub.f32 %v748, %v780
        %v813 = vsub.f32 %v749, %v781
        %v814 = vsub.f32 %v750, %v782
        %v815 = vsub.f32 %v751, %v783
        %v816 = vsub.f32 %v752, %v784
        %v817 = vsub.f32 %v753, %v785
        %v818 = vsub.f32 %v754, %v786
        %v819 = vsub.f32 %v755, %v787
        %v820 = vsub.f32 %v756, %v788
        %v821 = vsub.f32 %v757, %v789
        %v822 = vsub.f32 %v758, %v790
        %v823 = vsub.f32 %v759, %v791
        %v824 = vsub.f32 %v760, %v792
        %v825 = vsub.f32 %v761, %v793
        %v826 = vsub.f32 %v762, %v794
        %v827 = vmax.f32 %v795, 0.0
        %v828 = vmax.f32 %v796, 0.0
        %v829 = vmax.f32 %v797, 0.0
        %v830 = vmax.f32 %v798, 0.0
        %v831 = vmax.f32 %v799, 0.0
        %v832 = vmax.f32 %v800, 0.0
        %v833 = vmax.f32 %v801, 0.0
        %v834 = vmax.f32 %v802, 0.0
        %v835 = vmax.f32 %v803, 0.0
        %v836 = vmax.f32 %v804, 0.0
        %v837 = vmax.f32 %v805, 0.0
        %v838 = vmax.f32 %v806, 0.0
        %v839 = vmax.f32 %v807, 0.0
        %v840 = vmax.f32 %v808, 0.0
        %v841 = vmax.f32 %v809, 0.0
        %v842 = vmax.f32 %v810, 0.0
        %v843 = vmax.f32 %v811, 0.0
        %v844 = vmax.f32 %v812, 0.0
        %v845 = vmax.f32 %v813, 0.0
        %v846 = vmax.f32 %v814, 0.0
        %v847 = vmax.f32 %v815, 0.0
        %v848 = vmax.f32 %v816, 0.0
        %v849 = vmax.f32 %v817, 0.0
        %v850 = vmax.f32 %v818, 0.0
        %v851 = vmax.f32 %v819, 0.0
        %v852 = vmax.f32 %v820, 0.0
        %v853 = vmax.f32 %v821, 0.0
        %v854 = vmax.f32 %v822, 0.0
        %v855 = vmax.f32 %v823, 0.0
        %v856 = vmax.f32 %v824, 0.0
        %v857 = vmax.f32 %v825, 0.0
        %v858 = vmax.f32 %v826, 0.0
        %v859 = vadd.f32 %v827, 1.0
        %v860 = vadd.f32 %v828, 1.0
        %v861 = vadd.f32 %v829, 1.0
        %v862 = vadd.f32 %v830, 1.0
        %v863 = vadd.f32 %v831, 1.0
        %v864 = vadd.f32 %v832, 1.0
        %v865 = vadd.f32 %v833, 1.0
        %v866 = vadd.f32 %v834, 1.0
        %v867 = vadd.f32 %v835, 1.0
        %v868 = vadd.f32 %v836, 1.0
        %v869 = vadd.f32 %v837, 1.0
        %v870 = vadd.f32 %v838, 1.0
        %v871 = vadd.f32 %v839, 1.0
        %v872 = vadd.f32 %v840, 1.0
        %v873 = vadd.f32 %v841, 1.0
        %v874 = vadd.f32 %v842, 1.0
        %v875 = vadd.f32 %v843, 1.0
        %v876 = vadd.f32 %v844, 1.0
        %v877 = vadd.f32 %v845, 1.0
        %v878 = vadd.f32 %v846, 1.0
        %v879 = vadd.f32 %v847, 1.0
        %v880 = vadd.f32 %v848, 1.0
        %v881 = vadd.f32 %v849, 1.0
        %v882 = vadd.f32 %v850, 1.0
        %v883 = vadd.f32 %v851, 1.0
        %v884 = vadd.f32 %v852, 1.0
        %v885 = vadd.f32 %v853, 1.0
        %v886 = vadd.f32 %v854, 1.0
        %v887 = vadd.f32 %v855, 1.0
        %v888 = vadd.f32 %v856, 1.0
        %v889 = vadd.f32 %v857, 1.0
        %v890 = vadd.f32 %v858, 1.0
        %v891 = vrcp.pop %v859
        %v892 = vrcp.pop %v860
        %v893 = vrcp.pop %v861
        %v894 = vrcp.pop %v862
        %v895 = vrcp.pop %v863
        %v896 = vrcp.pop %v864
        %v897 = vrcp.pop %v865
        %v898 = vrcp.pop %v866
        %v899 = vrcp.pop %v867
        %v900 = vrcp.pop %v868
        %v901 = vrcp.pop %v869
        %v902 = vrcp.pop %v870
        %v903 = vrcp.pop %v871
        %v904 = vrcp.pop %v872
        %v905 = vrcp.pop %v873
        %v906 = vrcp.pop %v874
        %v907 = vrcp.pop %v875
        %v908 = vrcp.pop %v876
        %v909 = vrcp.pop %v877
        %v910 = vrcp.pop %v878
        %v911 = vrcp.pop %v879
        %v912 = vrcp.pop %v880
        %v913 = vrcp.pop %v881
        %v914 = vrcp.pop %v882
        %v915 = vrcp.pop %v883
        %v916 = vrcp.pop %v884
        %v917 = vrcp.pop %v885
        %v918 = vrcp.pop %v886
        %v919 = vrcp.pop %v887
        %v920 = vrcp.pop %v888
        %v921 = vrcp.pop %v889
        %v922 = vrcp.pop %v890
        %v923 = vmul.f32 %v891, %v891
        %v924 = vmul.f32 %v892, %v892
        %v925 = vmul.f32 %v893, %v893
        %v926 = vmul.f32 %v894, %v894
        %v927 = vmul.f32 %v895, %v895
        %v928 = vmul.f32 %v896, %v896
        %v929 = vmul.f32 %v897, %v897
        %v930 = vmul.f32 %v898, %v898
        %v931 = vmul.f32 %v899, %v899
        %v932 = vmul.f32 %v900, %v900
        %v933 = vmul.f32 %v901, %v901
        %v934 = vmul.f32 %v902, %v902
        %v935 = vmul.f32 %v903, %v903
        %v936 = vmul.f32 %v904, %v904
        %v937 = vmul.f32 %v905, %v905
        %v938 = vmul.f32 %v906, %v906
        %v939 = vmul.f32 %v907, %v907
        %v940 = vmul.f32 %v908, %v908
        %v941 = vmul.f32 %v909, %v909
        %v942 = vmul.f32 %v910, %v910
        %v943 = vmul.f32 %v911, %v911
        %v944 = vmul.f32 %v912, %v912
        %v945 = vmul.f32 %v913, %v913
        %v946 = vmul.f32 %v914, %v914
        %v947 = vmul.f32 %v915, %v915
        %v948 = vmul.f32 %v916, %v916
        %v949 = vmul.f32 %v917, %v917
        %v950 = vmul.f32 %v918, %v918
        %v951 = vmul.f32 %v919, %v919
        %v952 = vmul.f32 %v920, %v920
        %v953 = vmul.f32 %v921, %v921
        %v954 = vmul.f32 %v922, %v922
        %v955 = vmul.f32 %v923, %v923
        %v956 = vmul.f32 %v924, %v924
        %v957 = vmul.f32 %v925, %v925
        %v958 = vmul.f32 %v926, %v926
        %v959 = vmul.f32 %v927, %v927
        %v960 = vmul.f32 %v928, %v928
        %v961 = vmul.f32 %v929, %v929
        %v962 = vmul.f32 %v930, %v930
        %v963 = vmul.f32 %v931, %v931
        %v964 = vmul.f32 %v932, %v932
        %v965 = vmul.f32 %v933, %v933
        %v966 = vmul.f32 %v934, %v934
        %v967 = vmul.f32 %v935, %v935
        %v968 = vmul.f32 %v936, %v936
        %v969 = vmul.f32 %v937, %v937
        %v970 = vmul.f32 %v938, %v938
        %v971 = vmul.f32 %v939, %v939
        %v972 = vmul.f32 %v940, %v940
        %v973 = vmul.f32 %v941, %v941
        %v974 = vmul.f32 %v942, %v942
        %v975 = vmul.f32 %v943, %v943
        %v976 = vmul.f32 %v944, %v944
        %v977 = vmul.f32 %v945, %v945
        %v978 = vmul.f32 %v946, %v946
        %v979 = vmul.f32 %v947, %v947
        %v980 = vmul.f32 %v948, %v948
        %v981 = vmul.f32 %v949, %v949
        %v982 = vmul.f32 %v950, %v950
        %v983 = vmul.f32 %v951, %v951
        %v984 = vmul.f32 %v952, %v952
        %v985 = vmul.f32 %v953, %v953
        %v986 = vmul.f32 %v954, %v954
        %v987 = vmul.f32 %v955, %v955
        %v988 = vmul.f32 %v956, %v956
        %v989 = vmul.f32 %v957, %v957
        %v990 = vmul.f32 %v958, %v958
        %v991 = vmul.f32 %v959, %v959
        %v992 = vmul.f32 %v960, %v960
        %v993 = vmul.f32 %v961, %v961
        %v994 = vmul.f32 %v962, %v962
        %v995 = vmul.f32 %v963, %v963
        %v996 = vmul.f32 %v964, %v964
        %v997 = vmul.f32 %v965, %v965
        %v998 = vmul.f32 %v966, %v966
        %v999 = vmul.f32 %v967, %v967
        %v1000 = vmul.f32 %v968, %v968
        %v1001 = vmul.f32 %v969, %v969
        %v1002 = vmul.f32 %v970, %v970
        %v1003 = vmul.f32 %v971, %v971
        %v1004 = vmul.f32 %v972, %v972
        %v1005 = vmul.f32 %v973, %v973
        %v1006 = vmul.f32 %v974, %v974
        %v1007 = vmul.f32 %v975, %v975
        %v1008 = vmul.f32 %v976, %v976
        %v1009 = vmul.f32 %v977, %v977
        %v1010 = vmul.f32 %v978, %v978
        %v1011 = vmul.f32 %v979, %v979
        %v1012 = vmul.f32 %v980, %v980
        %v1013 = vmul.f32 %v981, %v981
        %v1014 = vmul.f32 %v982, %v982
        %v1015 = vmul.f32 %v983, %v983
        %v1016 = vmul.f32 %v984, %v984
        %v1017 = vmul.f32 %v985, %v985
        %v1018 = vmul.f32 %v986, %v986
        %v1019 = vmul.f32 %v987, %v923
        %v1020 = vmul.f32 %v988, %v924
        %v1021 = vmul.f32 %v989, %v925
        %v1022 = vmul.f32 %v990, %v926
        %v1023 = vmul.f32 %v991, %v927
        %v1024 = vmul.f32 %v992, %v928
        %v1025 = vmul.f32 %v993, %v929
        %v1026 = vmul.f32 %v994, %v930
        %v1027 = vmul.f32 %v995, %v931
        %v1028 = vmul.f32 %v996, %v932
        %v1029 = vmul.f32 %v997, %v933
        %v1030 = vmul.f32 %v998, %v934
        %v1031 = vmul.f32 %v999, %v935
        %v1032 = vmul.f32 %v1000, %v936
        %v1033 = vmul.f32 %v1001, %v937
        %v1034 = vmul.f32 %v1002, %v938
        %v1035 = vmul.f32 %v1003, %v939
        %v1036 = vmul.f32 %v1004, %v940
        %v1037 = vmul.f32 %v1005, %v941
        %v1038 = vmul.f32 %v1006, %v942
        %v1039 = vmul.f32 %v1007, %v943
        %v1040 = vmul.f32 %v1008, %v944
        %v1041 = vmul.f32 %v1009, %v945
        %v1042 = vmul.f32 %v1010, %v946
        %v1043 = vmul.f32 %v1011, %v947
        %v1044 = vmul.f32 %v1012, %v948
        %v1045 = vmul.f32 %v1013, %v949
        %v1046 = vmul.f32 %v1014, %v950
        %v1047 = vmul.f32 %v1015, %v951
        %v1048 = vmul.f32 %v1016, %v952
        %v1049 = vmul.f32 %v1017, %v953
        %v1050 = vmul.f32 %v1018, %v954
        %v1051 = vld [vmem:[%s3] sm:$0x1]
        %v1053 = vlaneseq
        %v1054 = vshrl.u32 %v1053, 7
        %v1055 = vsub.s32 0, %v1054
        %v1056 = vrot.slane %v1051, %v1055
        %v1058 = vmul.f32 %v1019, %v1056
        %v1059 = vmul.f32 %v1020, %v1056
        %v1060 = vmul.f32 %v1021, %v1056
        %v1061 = vmul.f32 %v1022, %v1056
        %v1062 = vmul.f32 %v1023, %v1056
        %v1063 = vmul.f32 %v1024, %v1056
        %v1064 = vmul.f32 %v1025, %v1056
        %v1065 = vmul.f32 %v1026, %v1056
        %v1066 = vmul.f32 %v1027, %v1056
        %v1067 = vmul.f32 %v1028, %v1056
        %v1068 = vmul.f32 %v1029, %v1056
        %v1069 = vmul.f32 %v1030, %v1056
        %v1070 = vmul.f32 %v1031, %v1056
        %v1071 = vmul.f32 %v1032, %v1056
        %v1072 = vmul.f32 %v1033, %v1056
        %v1073 = vmul.f32 %v1034, %v1056
        %v1074 = vmul.f32 %v1035, %v1056
        %v1075 = vmul.f32 %v1036, %v1056
        %v1076 = vmul.f32 %v1037, %v1056
        %v1077 = vmul.f32 %v1038, %v1056
        %v1078 = vmul.f32 %v1039, %v1056
        %v1079 = vmul.f32 %v1040, %v1056
        %v1080 = vmul.f32 %v1041, %v1056
        %v1081 = vmul.f32 %v1042, %v1056
        %v1082 = vmul.f32 %v1043, %v1056
        %v1083 = vmul.f32 %v1044, %v1056
        %v1084 = vmul.f32 %v1045, %v1056
        %v1085 = vmul.f32 %v1046, %v1056
        %v1086 = vmul.f32 %v1047, %v1056
        %v1087 = vmul.f32 %v1048, %v1056
        %v1088 = vmul.f32 %v1049, %v1056
        %v1089 = vmul.f32 %v1050, %v1056
        %1090 = vadd.xlane.f32.xlu0 %v1058
        %v1091 = vpop.xlane.xlu0 %1090
        %1092 = vadd.xlane.f32.xlu0 %v1059
        %v1093 = vpop.xlane.xlu0 %1092
        %1094 = vadd.xlane.f32.xlu0 %v1060
        %v1095 = vpop.xlane.xlu0 %1094
        %1096 = vadd.xlane.f32.xlu0 %v1061
        %v1097 = vpop.xlane.xlu0 %1096
        %1098 = vadd.xlane.f32.xlu0 %v1062
        %v1099 = vpop.xlane.xlu0 %1098
        %1100 = vadd.xlane.f32.xlu0 %v1063
        %v1101 = vpop.xlane.xlu0 %1100
        %1102 = vadd.xlane.f32.xlu0 %v1064
        %v1103 = vpop.xlane.xlu0 %1102
        %1104 = vadd.xlane.f32.xlu0 %v1065
        %v1105 = vpop.xlane.xlu0 %1104
        %1106 = vadd.xlane.f32.xlu0 %v1066
        %v1107 = vpop.xlane.xlu0 %1106
        %1108 = vadd.xlane.f32.xlu0 %v1067
        %v1109 = vpop.xlane.xlu0 %1108
        %1110 = vadd.xlane.f32.xlu0 %v1068
        %v1111 = vpop.xlane.xlu0 %1110
        %1112 = vadd.xlane.f32.xlu0 %v1069
        %v1113 = vpop.xlane.xlu0 %1112
        %1114 = vadd.xlane.f32.xlu0 %v1070
        %v1115 = vpop.xlane.xlu0 %1114
        %1116 = vadd.xlane.f32.xlu0 %v1071
        %v1117 = vpop.xlane.xlu0 %1116
        %1118 = vadd.xlane.f32.xlu0 %v1072
        %v1119 = vpop.xlane.xlu0 %1118
        %1120 = vadd.xlane.f32.xlu0 %v1073
        %v1121 = vpop.xlane.xlu0 %1120
        %1122 = vadd.xlane.f32.xlu0 %v1074
        %v1123 = vpop.xlane.xlu0 %1122
        %1124 = vadd.xlane.f32.xlu0 %v1075
        %v1125 = vpop.xlane.xlu0 %1124
        %1126 = vadd.xlane.f32.xlu0 %v1076
        %v1127 = vpop.xlane.xlu0 %1126
        %1128 = vadd.xlane.f32.xlu0 %v1077
        %v1129 = vpop.xlane.xlu0 %1128
        %1130 = vadd.xlane.f32.xlu0 %v1078
        %v1131 = vpop.xlane.xlu0 %1130
        %1132 = vadd.xlane.f32.xlu0 %v1079
        %v1133 = vpop.xlane.xlu0 %1132
        %1134 = vadd.xlane.f32.xlu0 %v1080
        %v1135 = vpop.xlane.xlu0 %1134
        %1136 = vadd.xlane.f32.xlu0 %v1081
        %v1137 = vpop.xlane.xlu0 %1136
        %1138 = vadd.xlane.f32.xlu0 %v1082
        %v1139 = vpop.xlane.xlu0 %1138
        %1140 = vadd.xlane.f32.xlu0 %v1083
        %v1141 = vpop.xlane.xlu0 %1140
        %1142 = vadd.xlane.f32.xlu0 %v1084
        %v1143 = vpop.xlane.xlu0 %1142
        %1144 = vadd.xlane.f32.xlu0 %v1085
        %v1145 = vpop.xlane.xlu0 %1144
        %1146 = vadd.xlane.f32.xlu0 %v1086
        %v1147 = vpop.xlane.xlu0 %1146
        %1148 = vadd.xlane.f32.xlu0 %v1087
        %v1149 = vpop.xlane.xlu0 %1148
        %1150 = vadd.xlane.f32.xlu0 %v1088
        %v1151 = vpop.xlane.xlu0 %1150
        %1152 = vadd.xlane.f32.xlu0 %v1089
        %v1153 = vpop.xlane.xlu0 %1152
        %v1154 = vrcp.pop %v1091
        %v1155 = vrcp.pop %v1093
        %v1156 = vrcp.pop %v1095
        %v1157 = vrcp.pop %v1097
        %v1158 = vrcp.pop %v1099
        %v1159 = vrcp.pop %v1101
        %v1160 = vrcp.pop %v1103
        %v1161 = vrcp.pop %v1105
        %v1162 = vrcp.pop %v1107
        %v1163 = vrcp.pop %v1109
        %v1164 = vrcp.pop %v1111
        %v1165 = vrcp.pop %v1113
        %v1166 = vrcp.pop %v1115
        %v1167 = vrcp.pop %v1117
        %v1168 = vrcp.pop %v1119
        %v1169 = vrcp.pop %v1121
        %v1170 = vrcp.pop %v1123
        %v1171 = vrcp.pop %v1125
        %v1172 = vrcp.pop %v1127
        %v1173 = vrcp.pop %v1129
        %v1174 = vrcp.pop %v1131
        %v1175 = vrcp.pop %v1133
        %v1176 = vrcp.pop %v1135
        %v1177 = vrcp.pop %v1137
        %v1178 = vrcp.pop %v1139
        %v1179 = vrcp.pop %v1141
        %v1180 = vrcp.pop %v1143
        %v1181 = vrcp.pop %v1145
        %v1182 = vrcp.pop %v1147
        %v1183 = vrcp.pop %v1149
        %v1184 = vrcp.pop %v1151
        %v1185 = vrcp.pop %v1153
        %v1186 = vmul.f32 %v1058, %v1154
        %v1187 = vmul.f32 %v1059, %v1155
        %v1188 = vmul.f32 %v1060, %v1156
        %v1189 = vmul.f32 %v1061, %v1157
        %v1190 = vmul.f32 %v1062, %v1158
        %v1191 = vmul.f32 %v1063, %v1159
        %v1192 = vmul.f32 %v1064, %v1160
        %v1193 = vmul.f32 %v1065, %v1161
        %v1194 = vmul.f32 %v1066, %v1162
        %v1195 = vmul.f32 %v1067, %v1163
        %v1196 = vmul.f32 %v1068, %v1164
        %v1197 = vmul.f32 %v1069, %v1165
        %v1198 = vmul.f32 %v1070, %v1166
        %v1199 = vmul.f32 %v1071, %v1167
        %v1200 = vmul.f32 %v1072, %v1168
        %v1201 = vmul.f32 %v1073, %v1169
        %v1202 = vmul.f32 %v1074, %v1170
        %v1203 = vmul.f32 %v1075, %v1171
        %v1204 = vmul.f32 %v1076, %v1172
        %v1205 = vmul.f32 %v1077, %v1173
        %v1206 = vmul.f32 %v1078, %v1174
        %v1207 = vmul.f32 %v1079, %v1175
        %v1208 = vmul.f32 %v1080, %v1176
        %v1209 = vmul.f32 %v1081, %v1177
        %v1210 = vmul.f32 %v1082, %v1178
        %v1211 = vmul.f32 %v1083, %v1179
        %v1212 = vmul.f32 %v1084, %v1180
        %v1213 = vmul.f32 %v1085, %v1181
        %v1214 = vmul.f32 %v1086, %v1182
        %v1215 = vmul.f32 %v1087, %v1183
        %v1216 = vmul.f32 %v1088, %v1184
        %v1217 = vmul.f32 %v1089, %v1185
        %1218 = vst [vmem:[%s222] sm:$0xff] %v827
        %1219 = vst [vmem:[%s222 + $0x8] sm:$0xff] %v828
        %1220 = vst [vmem:[%s222 + $0x10] sm:$0xff] %v829
        %1221 = vst [vmem:[%s222 + $0x18] sm:$0xff] %v830
        %1222 = vst [vmem:[%s222 + $0x20] sm:$0xff] %v831
        %1223 = vst [vmem:[%s222 + $0x28] sm:$0xff] %v832
        %1224 = vst [vmem:[%s222 + $0x30] sm:$0xff] %v833
        %1225 = vst [vmem:[%s222 + $0x38] sm:$0xff] %v834
        %1226 = vst [vmem:[%s222 + $0x40] sm:$0xff] %v835
        %1227 = vst [vmem:[%s222 + $0x48] sm:$0xff] %v836
        %1228 = vst [vmem:[%s222 + $0x50] sm:$0xff] %v837
        %1229 = vst [vmem:[%s222 + $0x58] sm:$0xff] %v838
        %1230 = vst [vmem:[%s222 + $0x60] sm:$0xff] %v839
        %1231 = vst [vmem:[%s222 + $0x68] sm:$0xff] %v840
        %1232 = vst [vmem:[%s222 + $0x70] sm:$0xff] %v841
        %1233 = vst [vmem:[%s222 + $0x78] sm:$0xff] %v842
        %1234 = vst [vmem:[%s222 + $0x80] sm:$0xff] %v843
        %1235 = vst [vmem:[%s222 + $0x88] sm:$0xff] %v844
        %1236 = vst [vmem:[%s222 + $0x90] sm:$0xff] %v845
        %1237 = vst [vmem:[%s222 + $0x98] sm:$0xff] %v846
        %1238 = vst [vmem:[%s222 + $0xa0] sm:$0xff] %v847
        %1239 = vst [vmem:[%s222 + $0xa8] sm:$0xff] %v848
        %1240 = vst [vmem:[%s222 + $0xb0] sm:$0xff] %v849
        %1241 = vst [vmem:[%s222 + $0xb8] sm:$0xff] %v850
        %1242 = vst [vmem:[%s222 + $0xc0] sm:$0xff] %v851
        %1243 = vst [vmem:[%s222 + $0xc8] sm:$0xff] %v852
        %1244 = vst [vmem:[%s222 + $0xd0] sm:$0xff] %v853
        %1245 = vst [vmem:[%s222 + $0xd8] sm:$0xff] %v854
        %1246 = vst [vmem:[%s222 + $0xe0] sm:$0xff] %v855
        %1247 = vst [vmem:[%s222 + $0xe8] sm:$0xff] %v856
        %1248 = vst [vmem:[%s222 + $0xf0] sm:$0xff] %v857
        %1249 = vst [vmem:[%s222 + $0xf8] sm:$0xff] %v858
        %1250 = vst [vmem:[%s229] sm:$0xff] %v1186
        %1251 = vst [vmem:[%s229 + $0x8] sm:$0xff] %v1187
        %1252 = vst [vmem:[%s229 + $0x10] sm:$0xff] %v1188
        %1253 = vst [vmem:[%s229 + $0x18] sm:$0xff] %v1189
        %1254 = vst [vmem:[%s229 + $0x20] sm:$0xff] %v1190
        %1255 = vst [vmem:[%s229 + $0x28] sm:$0xff] %v1191
        %1256 = vst [vmem:[%s229 + $0x30] sm:$0xff] %v1192
        %1257 = vst [vmem:[%s229 + $0x38] sm:$0xff] %v1193
        %1258 = vst [vmem:[%s229 + $0x40] sm:$0xff] %v1194
        %1259 = vst [vmem:[%s229 + $0x48] sm:$0xff] %v1195
        %1260 = vst [vmem:[%s229 + $0x50] sm:$0xff] %v1196
        %1261 = vst [vmem:[%s229 + $0x58] sm:$0xff] %v1197
        %1262 = vst [vmem:[%s229 + $0x60] sm:$0xff] %v1198
        %1263 = vst [vmem:[%s229 + $0x68] sm:$0xff] %v1199
        %1264 = vst [vmem:[%s229 + $0x70] sm:$0xff] %v1200
        %1265 = vst [vmem:[%s229 + $0x78] sm:$0xff] %v1201
        %1266 = vst [vmem:[%s229 + $0x80] sm:$0xff] %v1202
        %1267 = vst [vmem:[%s229 + $0x88] sm:$0xff] %v1203
        %1268 = vst [vmem:[%s229 + $0x90] sm:$0xff] %v1204
        %1269 = vst [vmem:[%s229 + $0x98] sm:$0xff] %v1205
        %1270 = vst [vmem:[%s229 + $0xa0] sm:$0xff] %v1206
        %1271 = vst [vmem:[%s229 + $0xa8] sm:$0xff] %v1207
        %1272 = vst [vmem:[%s229 + $0xb0] sm:$0xff] %v1208
        %1273 = vst [vmem:[%s229 + $0xb8] sm:$0xff] %v1209
        %1274 = vst [vmem:[%s229 + $0xc0] sm:$0xff] %v1210
        %1275 = vst [vmem:[%s229 + $0xc8] sm:$0xff] %v1211
        %1276 = vst [vmem:[%s229 + $0xd0] sm:$0xff] %v1212
        %1277 = vst [vmem:[%s229 + $0xd8] sm:$0xff] %v1213
        %1278 = vst [vmem:[%s229 + $0xe0] sm:$0xff] %v1214
        %1279 = vst [vmem:[%s229 + $0xe8] sm:$0xff] %v1215
        %1280 = vst [vmem:[%s229 + $0xf0] sm:$0xff] %v1216
        %1281 = vst [vmem:[%s229 + $0xf8] sm:$0xff] %v1217
        %s1282 = sand.u32 %s120, 1
        %s1283 = scalar_lea.sflag [#allocation3], %s1282
        %s1284 = sand.u32 %s120, 1
        %s1285 = smul.addr %s1284, 256
        %s1286 = scalar_lea.vmem [#allocation2], %s1285
        %s1287 = sand.u32 %s146, 1
        %s1288 = scalar_lea.sflag [#allocation5], %s1287
        %s1289 = sand.u32 %s146, 1
        %s1290 = smul.addr %s1289, 256
        %s1291 = scalar_lea.vmem [#allocation4], %s1290
        // Predicated region
        $region37: #{tpu_custom_call.1} parent=35 // pred_check
          %p1292 = pneg %p130
        $region38: #{tpu_custom_call.1} parent=35 // pred_check_branch
          %1294 = sbr.rel (%p1292) target = $region40
        $region39: #{tpu_custom_call.1} parent=35 // pred_region
          %s1295 = smul.u32 32, %s23
          %s1297 = ssub.s32 4096, 4096
          %1298 = vsyncadd %s1283, %s1297
          %s1299 = smul.addr %s1295, 128
          %s1300 = scalar_lea.hbm %s4, %s1299
          %s1301 = sshll.u32 %s1286, 4
          %s1302 = int_to_ptr.vmem [resolvable:$true] %s1301
          %1307 = dma.vmem_to_hbm [thread:$0]  %s1302, 4096, %s1300, %s1283, 128, 128, 8
        $region40: #{tpu_custom_call.1} parent=35 // pred_fallthru
          _
        // Predicated region
        $region41: #{tpu_custom_call.1} parent=35 // pred_check
          %p1308 = pneg %p156
        $region42: #{tpu_custom_call.1} parent=35 // pred_check_branch
          %1310 = sbr.rel (%p1308) target = $region44
        $region43: #{tpu_custom_call.1} parent=35 // pred_region
          %s1311 = smul.u32 32, %s23
          %s1313 = ssub.s32 4096, 4096
          %1314 = vsyncadd %s1288, %s1313
          %s1315 = smul.addr %s1311, 128
          %s1316 = scalar_lea.hbm %s5, %s1315
          %s1317 = sshll.u32 %s1291, 4
          %s1318 = int_to_ptr.vmem [resolvable:$true] %s1317
          %1323 = dma.vmem_to_hbm [thread:$0]  %s1318, 4096, %s1316, %s1288, 128, 128, 8
        $region44: #{tpu_custom_call.1} parent=35 // pred_fallthru
          _
      $region36: #{tpu_custom_call.1} parent=5 // pred_fallthru
        _
      %p1324 = scmp.le.s32.totalorder 2, %s18
      // Predicated region
      $region45: #{tpu_custom_call.1} parent=5 // pred_check
        %p1325 = pneg %p1324
      $region46: #{tpu_custom_call.1} parent=5 // pred_check_branch
        %1327 = sbr.rel (%p1325) target = $region48
      $region47: #{tpu_custom_call.1} parent=5 // pred_region
        %s1328 = ssub.s32 %s18, 2
        // Predicated region
        $region49: #{tpu_custom_call.1} parent=47 // pred_check
          %p1329 = pneg %p136
        $region50: #{tpu_custom_call.1} parent=47 // pred_check_branch
          %1331 = sbr.rel (%p1329) target = $region52
        $region51: #{tpu_custom_call.1} parent=47 // pred_region
          %s1332 = sand.u32 %s121, 1
          %s1333 = scalar_lea.sflag [#allocation3], %s1332
          %s1334 = sand.u32 %s121, 1
          %s1335 = smul.addr %s1334, 256
          %s1336 = scalar_lea.vmem [#allocation2], %s1335
          %1337 = dma.done %s1333, 4096
        $region52: #{tpu_custom_call.1} parent=47 // pred_fallthru
          _
        // Predicated region
        $region53: #{tpu_custom_call.1} parent=47 // pred_check
          %p1338 = pneg %p162
        $region54: #{tpu_custom_call.1} parent=47 // pred_check_branch
          %1340 = sbr.rel (%p1338) target = $region56
        $region55: #{tpu_custom_call.1} parent=47 // pred_region
          %s1341 = sand.u32 %s147, 1
          %s1342 = scalar_lea.sflag [#allocation5], %s1341
          %s1343 = sand.u32 %s147, 1
          %s1344 = smul.addr %s1343, 256
          %s1345 = scalar_lea.vmem [#allocation4], %s1344
          %1346 = dma.done %s1342, 4096
        $region56: #{tpu_custom_call.1} parent=47 // pred_fallthru
          _
      $region48: #{tpu_custom_call.1} parent=5 // pred_fallthru
        _
    $region6: #{tpu_custom_call.1} parent=1 // loop_footer
      %s22 = sadd.s32 1, %s18
    $region7: #{tpu_custom_call.1} parent=1 // loop_footer_branch
      %17 = sbr.rel target = $region3
    $region8: #{tpu_custom_call.1} parent=1 // loop_exit
      _
    %1347 = vsyncpa [#allocation3], 1
    %s1348 = scalar_lea.sflag [#allocation3], 1
    %1349 = vsyncpa %s1348, 1
    %1350 = vsyncpa [#allocation5], 1
    %s1351 = scalar_lea.sflag [#allocation5], 1
    %1352 = vsyncpa %s1351, 1

</llo_original>
